<compile_context>
chip_gen: v6e
topology: v6e:2x2x1
jax: 0.10.0
libtpu: 0.0.40
codegen_flags: <defaults>
</compile_context>

<pallas_src>
import functools

import jax
import jax.numpy as jnp
from jax import lax
from jax.experimental import pallas as pl
from jax.experimental.pallas import tpu as pltpu


def find_multiple(n: int, k: int) -> int:
    if n % k == 0:
        return n
    return n + k - n % k


def _pick_hidden_tile(H: int, D: int, w_itemsize: int,
                      weight_bytes_budget: int = 24 << 20) -> int:
    """Largest lane-aligned (multiple-of-128) divisor of H whose double-buffered
    weight tiles (w1 + w3 + w2) stay within `weight_bytes_budget` of VMEM."""
    cap = weight_bytes_budget // (6 * D * w_itemsize)   # 2 buffers x 3 weight tiles
    cap = min(max(cap, 128), H)
    cap -= cap % 128
    for cand in range(max(cap, 128), 127, -128):
        if H % cand == 0:
            return cand
    return H  # fallback: whole hidden dim as a single full-extent tile


# Contract last dims of both operands == x @ W.T with W in PyTorch (out, in) layout.
_CONTRACT_LAST = (((1,), (1,)), ((), ()))


def _ffn_kernel_single(x_ref, w1_ref, w3_ref, w2_ref, o_ref):
    """Whole hidden dim in one tile: no accumulator scratch, direct store."""
    x = x_ref[...]
    h1 = lax.dot_general(x, w1_ref[...], _CONTRACT_LAST,
                         preferred_element_type=jnp.float32)      # (tm, H)
    h3 = lax.dot_general(x, w3_ref[...], _CONTRACT_LAST,
                         preferred_element_type=jnp.float32)      # (tm, H)
    h = (h1 * jax.nn.sigmoid(h1)) * h3                            # SiLU*gate in f32
    o_ref[...] = lax.dot_general(h.astype(x.dtype), w2_ref[...], _CONTRACT_LAST,
                                 preferred_element_type=jnp.float32
                                 ).astype(o_ref.dtype)
    # TODO(synk): ffn_dropout (nn.Dropout) is identity in eval mode; not applied.


def _ffn_kernel_acc(x_ref, w1_ref, w3_ref, w2_ref, o_ref, acc_ref):
    """Hidden dim tiled along the reduction ('arbitrary', last) grid axis.

    acc_ref: (tm, D) f32 accumulator, resident across the H axis.
    """
    k = pl.program_id(1)

    x = x_ref[...]
    h1 = lax.dot_general(x, w1_ref[...], _CONTRACT_LAST,
                         preferred_element_type=jnp.float32)      # (tm, th)
    h3 = lax.dot_general(x, w3_ref[...], _CONTRACT_LAST,
                         preferred_element_type=jnp.float32)      # (tm, th)
    h = (h1 * jax.nn.sigmoid(h1)) * h3
    partial = lax.dot_general(h.astype(x.dtype), w2_ref[...], _CONTRACT_LAST,
                              preferred_element_type=jnp.float32)  # (tm, D)

    @pl.when(k == 0)
    def _():                    # overwrite: skips zero-init pass + first acc read
        acc_ref[...] = partial

    @pl.when(k > 0)
    def _():
        acc_ref[...] += partial

    @pl.when(k == pl.num_programs(1) - 1)
    def _():
        o_ref[...] = acc_ref[...].astype(o_ref.dtype)
    # TODO(synk): ffn_dropout (nn.Dropout) is identity in eval mode; not applied.


@functools.partial(jax.jit, static_argnames=("tm", "th"))
def feed_forward(x, w1, w3, w2, *, tm=256, th=None):
    """x: (B, T, D); w1, w3: (H, D); w2: (D, H)  (PyTorch (out, in) layout)."""
    B, T, D = x.shape
    H, Din = w1.shape
    assert Din == D and w3.shape == (H, D) and w2.shape == (D, H)
    M = B * T

    # Token tile: multiple of 8 sublanes, no bigger than the (padded) token count.
    tm = min(tm, find_multiple(M, 8))
    M_pad = find_multiple(M, tm)

    # Hidden tile: lane-aligned divisor of H sized from a VMEM budget.
    if th is None:
        th = _pick_hidden_tile(H, D, w1.dtype.itemsize)
    assert H % th == 0, "hidden tile must divide the hidden dim"

    n_m = M_pad // tm
    n_h = H // th

    x2d = x.reshape(M, D)
    if M_pad != M:
        x2d = jnp.pad(x2d, ((0, M_pad - M), (0, 0)))

    xb = x2d.dtype.itemsize
    wb = w1.dtype.itemsize

    # Advisory cost estimate for XLA scheduling around the custom call.
    bytes_accessed = (M_pad * D * xb            # x (each tile fetched once)
                      + n_m * 3 * H * D * wb    # weights streamed once per token tile
                      + M_pad * D * xb)         # out
    cost = pl.CostEstimate(flops=6 * M_pad * D * H,
                           transcendentals=M_pad * H,
                           bytes_accessed=int(bytes_accessed))

    # Explicit VMEM budget: double-buffered x/out/weight tiles + f32 accumulator.
    tile_bytes = 2 * (tm * D * xb              # x tile
                      + tm * D * xb            # out tile
                      + 2 * th * D * wb        # w1, w3 tiles
                      + D * th * wb)           # w2 tile
    vmem_limit = tile_bytes + tm * D * 4 + (4 << 20)
    vmem_limit = int(max(32 << 20, min(vmem_limit, 128 << 20)))

    if n_h == 1:
        out2d = pl.pallas_call(
            _ffn_kernel_single,
            out_shape=jax.ShapeDtypeStruct((M_pad, D), x.dtype),
            grid_spec=pltpu.PrefetchScalarGridSpec(
                num_scalar_prefetch=0,
                grid=(n_m,),
                in_specs=[
                    pl.BlockSpec((tm, D), lambda i: (i, 0)),   # x tile
                    pl.BlockSpec((H, D), lambda i: (0, 0)),    # w1 (out, in)
                    pl.BlockSpec((H, D), lambda i: (0, 0)),    # w3 (out, in)
                    pl.BlockSpec((D, H), lambda i: (0, 0)),    # w2 (out, in)
                ],
                out_specs=pl.BlockSpec((tm, D), lambda i: (i, 0)),
            ),
            compiler_params=pltpu.CompilerParams(
                dimension_semantics=("parallel",),
                vmem_limit_bytes=vmem_limit),
            cost_estimate=cost,
        )(x2d, w1, w3, w2)
    else:
        out2d = pl.pallas_call(
            _ffn_kernel_acc,
            out_shape=jax.ShapeDtypeStruct((M_pad, D), x.dtype),
            grid_spec=pltpu.PrefetchScalarGridSpec(
                num_scalar_prefetch=0,
                grid=(n_m, n_h),                                  # reduction axis last
                in_specs=[
                    pl.BlockSpec((tm, D), lambda i, k: (i, 0)),   # x tile (fetched once per i)
                    pl.BlockSpec((th, D), lambda i, k: (k, 0)),   # w1 tile (out, in)
                    pl.BlockSpec((th, D), lambda i, k: (k, 0)),   # w3 tile (out, in)
                    pl.BlockSpec((D, th), lambda i, k: (0, k)),   # w2 tile (out, in)
                ],
                out_specs=pl.BlockSpec((tm, D), lambda i, k: (i, 0)),
                scratch_shapes=[pltpu.VMEM((tm, D), jnp.float32)],
            ),
            compiler_params=pltpu.CompilerParams(
                dimension_semantics=("parallel", "arbitrary"),
                vmem_limit_bytes=vmem_limit),
            cost_estimate=cost,
        )(x2d, w1, w3, w2)

    if M_pad != M:
        out2d = out2d[:M]
    return out2d.reshape(B, T, D)


def feed_forward_ref(x, w1, w3, w2):
    """Pure-JAX reference matching the PyTorch forward (eval mode)."""
    h1 = x @ w1.T
    h3 = x @ w3.T
    return (jax.nn.silu(h1) * h3) @ w2.T


if __name__ == "__main__":
    # Small config consistent with ModelArgs: dim=128, multiple_of=128
    dim = 128
    multiple_of = 128
    hidden_dim = 4 * dim
    hidden_dim = int(2 * hidden_dim / 3)
    hidden_dim = find_multiple(hidden_dim, multiple_of)  # -> 384

    key = jax.random.PRNGKey(0)
    kx, k1, k2, k3 = jax.random.split(key, 4)
    # PyTorch nn.Linear weight layout: (out_features, in_features)
    w1 = jax.random.normal(k1, (hidden_dim, dim), dtype=jnp.float32) * 0.02
    w3 = jax.random.normal(k3, (hidden_dim, dim), dtype=jnp.float32) * 0.02
    w2 = jax.random.normal(k2, (dim, hidden_dim), dtype=jnp.float32) * 0.02

    # Case 1: even token count, single hidden tile (fast path, no accumulator).
    B, T = 2, 8
    x = jax.random.normal(kx, (B, T, dim), dtype=jnp.float32)
    out = jax.block_until_ready(feed_forward(x, w1, w3, w2))
    ref = feed_forward_ref(x, w1, w3, w2)
    assert out.shape == (B, T, dim)
    assert jnp.allclose(out, ref, atol=1e-4, rtol=1e-4), "mismatch (single-tile path)"

    # Case 2: ragged token count (exercises the padding path).
    B2, T2 = 2, 5
    x2 = jax.random.normal(kx, (B2, T2, dim), dtype=jnp.float32)
    out2 = jax.block_until_ready(feed_forward(x2, w1, w3, w2))
    ref2 = feed_forward_ref(x2, w1, w3, w2)
    assert out2.shape == (B2, T2, dim)
    assert jnp.allclose(out2, ref2, atol=1e-4, rtol=1e-4), "mismatch (ragged M path)"

    # Case 3: force hidden tiling (th=128 -> 3 reduction steps) to exercise the
    # resident-accumulator kernel.
    out3 = jax.block_until_ready(feed_forward(x, w1, w3, w2, th=128))
    assert jnp.allclose(out3, ref, atol=1e-4, rtol=1e-4), "mismatch (accumulator path)"

    print("KERNEL_OK")
</pallas_src>

<mosaic_0001>
module attributes {stable_mosaic.version = 11 : i64} {
  func.func @_ffn_kernel_single(%arg0: i32, %arg1: memref<16x128xf32, #tpu.memory_space<vmem>>, %arg2: memref<384x128xf32, #tpu.memory_space<vmem>>, %arg3: memref<384x128xf32, #tpu.memory_space<vmem>>, %arg4: memref<128x384xf32, #tpu.memory_space<vmem>>, %arg5: memref<16x128xf32, #tpu.memory_space<vmem>>) attributes {dimension_semantics = [#tpu.dimension_semantics<parallel>], iteration_bounds = array<i64: 1>, scalar_prefetch = 0 : i64, scratch_operands = 0 : i64, tpu.core_type = #tpu.core_type<tc>, window_params = [{transform_indices = @transform_0, window_bounds = array<i64: 16, 128>}, {pipeline_mode = #tpu.pipeline_mode<synchronous>, transform_indices = @transform_1, window_bounds = array<i64: 384, 128>}, {pipeline_mode = #tpu.pipeline_mode<synchronous>, transform_indices = @transform_2, window_bounds = array<i64: 384, 128>}, {pipeline_mode = #tpu.pipeline_mode<synchronous>, transform_indices = @transform_3, window_bounds = array<i64: 128, 384>}, {transform_indices = @transform_4, window_bounds = array<i64: 16, 128>}]} {
    %c0 = arith.constant 0 : index
    %c0_0 = arith.constant 0 : index
    %0 = vector.load %arg1[%c0, %c0_0] : memref<16x128xf32, #tpu.memory_space<vmem>>, vector<16x128xf32>
    %c0_1 = arith.constant 0 : index
    %c0_2 = arith.constant 0 : index
    %1 = vector.load %arg2[%c0_1, %c0_2] : memref<384x128xf32, #tpu.memory_space<vmem>>, vector<384x128xf32>
    %cst = arith.constant dense<0.000000e+00> : vector<16x384xf32>
    %2 = tpu.matmul %0, %1, %cst {dimension_numbers = #tpu.dot_dimension_numbers<[1], [1], [0], [0], [0, 0, 1, 0], [], []>} : vector<16x128xf32>, vector<384x128xf32>, vector<16x384xf32> -> vector<16x384xf32>
    %c0_3 = arith.constant 0 : index
    %c0_4 = arith.constant 0 : index
    %3 = vector.load %arg3[%c0_3, %c0_4] : memref<384x128xf32, #tpu.memory_space<vmem>>, vector<384x128xf32>
    %cst_5 = arith.constant dense<0.000000e+00> : vector<16x384xf32>
    %4 = tpu.matmul %0, %3, %cst_5 {dimension_numbers = #tpu.dot_dimension_numbers<[1], [1], [0], [0], [0, 0, 1, 0], [], []>} : vector<16x128xf32>, vector<384x128xf32>, vector<16x384xf32> -> vector<16x384xf32>
    %5 = arith.negf %2 : vector<16x384xf32>
    %6 = math.exp %5 : vector<16x384xf32>
    %cst_6 = arith.constant 1.000000e+00 : f32
    %7 = vector.broadcast %cst_6 : f32 to vector<16x384xf32>
    %8 = arith.addf %7, %6 : vector<16x384xf32>
    %9 = arith.divf %7, %8 : vector<16x384xf32>
    %10 = arith.mulf %2, %9 : vector<16x384xf32>
    %11 = arith.mulf %10, %4 : vector<16x384xf32>
    %c0_7 = arith.constant 0 : index
    %c0_8 = arith.constant 0 : index
    %12 = vector.load %arg4[%c0_7, %c0_8] : memref<128x384xf32, #tpu.memory_space<vmem>>, vector<128x384xf32>
    %cst_9 = arith.constant dense<0.000000e+00> : vector<16x128xf32>
    %13 = tpu.matmul %11, %12, %cst_9 {dimension_numbers = #tpu.dot_dimension_numbers<[1], [1], [0], [0], [0, 0, 1, 0], [], []>} : vector<16x384xf32>, vector<128x384xf32>, vector<16x128xf32> -> vector<16x128xf32>
    %c0_10 = arith.constant 0 : index
    %c0_11 = arith.constant 0 : index
    %14 = vector.load %arg5[%c0_10, %c0_11] : memref<16x128xf32, #tpu.memory_space<vmem>>, vector<16x128xf32>
    tpu.vector_store %arg5[%c0_10, %c0_11], %13 {strides = array<i32>} : memref<16x128xf32, #tpu.memory_space<vmem>>, vector<16x128xf32>,
    return
  }
  func.func @transform_0(%arg0: i32) -> (i32, i32) {
    %c0_i32 = arith.constant 0 : i32
    %c0_i32_0 = arith.constant 0 : i32
    return %arg0, %c0_i32 : i32, i32
  }
  func.func @transform_1(%arg0: i32) -> (i32, i32) {
    %c0_i32 = arith.constant 0 : i32
    %c0_i32_0 = arith.constant 0 : i32
    %c0_i32_1 = arith.constant 0 : i32
    return %c0_i32, %c0_i32_0 : i32, i32
  }
  func.func @transform_2(%arg0: i32) -> (i32, i32) {
    %c0_i32 = arith.constant 0 : i32
    %c0_i32_0 = arith.constant 0 : i32
    %c0_i32_1 = arith.constant 0 : i32
    return %c0_i32, %c0_i32_0 : i32, i32
  }
  func.func @transform_3(%arg0: i32) -> (i32, i32) {
    %c0_i32 = arith.constant 0 : i32
    %c0_i32_0 = arith.constant 0 : i32
    %c0_i32_1 = arith.constant 0 : i32
    return %c0_i32, %c0_i32_0 : i32, i32
  }
  func.func @transform_4(%arg0: i32) -> (i32, i32) {
    %c0_i32 = arith.constant 0 : i32
    %c0_i32_0 = arith.constant 0 : i32
    return %arg0, %c0_i32 : i32, i32
  }
}

</mosaic_0001>

<llo_original>
// kernel: feed_forward.1
$region0: #{feed_forward.1}
  #allocation0 [shape = 'u32[]', space=smem, size = 0x4, offset = 0x4, fixed_abs, tag = 'smem constant byte address 0x4 - core index']
  #allocation1 [shape = 'u32[144,128]{1,0:T(1,128)}', space=vmem, size = 0x12000, scoped, tag = 'internal scratch']
  %s0 = inlined_call_operand.hbm [shape: f32[16,128], index: 0, kind: input, shape index: {}]
  %s1 = inlined_call_operand.hbm [shape: f32[384,128], index: 1, kind: input, shape index: {}]
  %s2 = inlined_call_operand.hbm [shape: f32[384,128], index: 2, kind: input, shape index: {}]
  %s3 = inlined_call_operand.hbm [shape: f32[128,384], index: 3, kind: input, shape index: {}]
  %s4 = inlined_call_operand.hbm [shape: f32[16,128], index: 4, kind: output, shape index: {}]
  %s5 = sld [smem:[#allocation0]]
  $region42: #{feed_forward.1} parent=0
    _
  %s7 = ssub.s32 1, %s5
  %s8 = scalar_select 0, %s7, %s5
  $region1: #{feed_forward.1} parent=0
    #allocation2 [shape = 'u8[8192]{0}', space=vmem, size = 0x2000, scoped, tag = 'input window, operand 0, single buffered']
    #allocation3 [shape = 's32[1]{0}', space=sflag, size = 0x4, scoped, tag = 'scoped memory for feed_forward.1']
    #allocation4 [shape = 's32[1]{0}', space=sflag, size = 0x4, scoped, tag = 'scoped memory for feed_forward.1']
    #allocation5 [shape = 'u8[196608]{0}', space=vmem, size = 0x30000, scoped, tag = 'input window, operand 1, single buffered']
    #allocation6 [shape = 's32[1]{0}', space=sflag, size = 0x4, scoped, tag = 'scoped memory for feed_forward.1']
    #allocation7 [shape = 'u8[196608]{0}', space=vmem, size = 0x30000, scoped, tag = 'input window, operand 2, single buffered']
    #allocation8 [shape = 'u8[196608]{0}', space=vmem, size = 0x30000, scoped, tag = 'input window, operand 3, single buffered']
    #allocation9 [shape = 's32[1]{0}', space=sflag, size = 0x4, scoped, tag = 'scoped memory for feed_forward.1']
    #allocation10 [shape = 'u8[8192]{0}', space=vmem, size = 0x2000, scoped, tag = 'output window, operand 0, single buffered']
    %9 = vsyncpa [#allocation3], 0
    %10 = vsyncpa [#allocation6], 0
    %11 = vsyncpa [#allocation9], 0
    %12 = vsyncpa [#allocation4], 0
    // Predicated region
    $region2: #{feed_forward.1} parent=1 // pred_check
      _
    $region3: #{feed_forward.1} parent=1 // pred_check_branch
      %14 = sbr.rel (0) target = $region5
    $region4: #{feed_forward.1} parent=1 // pred_region
      %s16 = ssub.s32 256, 256
      %17 = vsyncadd [#allocation3], %s16
      %s18 = sshll.u32 [#allocation2], 4
      %s19 = int_to_ptr.vmem [resolvable:$true] %s18
      %24 = dma.hbm_to_vmem [thread:$0]  %s0, 256, %s19, [#allocation3], 128, 128, 8
    $region5: #{feed_forward.1} parent=1 // pred_fallthru
      _
    // Predicated region
    $region6: #{feed_forward.1} parent=1 // pred_check
      _
    $region7: #{feed_forward.1} parent=1 // pred_check_branch
      %26 = sbr.rel (0) target = $region9
    $region8: #{feed_forward.1} parent=1 // pred_region
      %s28 = ssub.s32 6144, 6144
      %29 = vsyncadd [#allocation6], %s28
      %s30 = sshll.u32 [#allocation5], 4
      %s31 = int_to_ptr.vmem [resolvable:$true] %s30
      %36 = dma.hbm_to_vmem [thread:$0]  %s1, 6144, %s31, [#allocation6], 128, 128, 8
    $region9: #{feed_forward.1} parent=1 // pred_fallthru
      _
    // Predicated region
    $region10: #{feed_forward.1} parent=1 // pred_check
      _
    $region11: #{feed_forward.1} parent=1 // pred_check_branch
      %38 = sbr.rel (0) target = $region13
    $region12: #{feed_forward.1} parent=1 // pred_region
      %s40 = ssub.s32 6144, 6144
      %41 = vsyncadd [#allocation6], %s40
      %s42 = sshll.u32 [#allocation7], 4
      %s43 = int_to_ptr.vmem [resolvable:$true] %s42
      %48 = dma.hbm_to_vmem [thread:$0]  %s2, 6144, %s43, [#allocation6], 128, 128, 8
    $region13: #{feed_forward.1} parent=1 // pred_fallthru
      _
    // Predicated region
    $region14: #{feed_forward.1} parent=1 // pred_check
      _
    $region15: #{feed_forward.1} parent=1 // pred_check_branch
      %50 = sbr.rel (0) target = $region17
    $region16: #{feed_forward.1} parent=1 // pred_region
      %s52 = ssub.s32 6144, 6144
      %53 = vsyncadd [#allocation9], %s52
      %s54 = sshll.u32 [#allocation8], 4
      %s55 = int_to_ptr.vmem [resolvable:$true] %s54
      %60 = dma.hbm_to_vmem [thread:$0]  %s3, 6144, %s55, [#allocation9], 384, 384, 24
    $region17: #{feed_forward.1} parent=1 // pred_fallthru
      _
    // Predicated region
    $region18: #{feed_forward.1} parent=1 // pred_check
      _
    $region19: #{feed_forward.1} parent=1 // pred_check_branch
      %62 = sbr.rel (0) target = $region21
    $region20: #{feed_forward.1} parent=1 // pred_region
      %63 = dma.done [#allocation3], 256
    $region21: #{feed_forward.1} parent=1 // pred_fallthru
      _
    // Predicated region
    $region22: #{feed_forward.1} parent=1 // pred_check
      _
    $region23: #{feed_forward.1} parent=1 // pred_check_branch
      %65 = sbr.rel (0) target = $region25
    $region24: #{feed_forward.1} parent=1 // pred_region
      %66 = dma.done [#allocation6], 6144
    $region25: #{feed_forward.1} parent=1 // pred_fallthru
      _
    // Predicated region
    $region26: #{feed_forward.1} parent=1 // pred_check
      _
    $region27: #{feed_forward.1} parent=1 // pred_check_branch
      %68 = sbr.rel (0) target = $region29
    $region28: #{feed_forward.1} parent=1 // pred_region
      %69 = dma.done [#allocation6], 6144
    $region29: #{feed_forward.1} parent=1 // pred_fallthru
      _
    // Predicated region
    $region30: #{feed_forward.1} parent=1 // pred_check
      _
    $region31: #{feed_forward.1} parent=1 // pred_check_branch
      %71 = sbr.rel (0) target = $region33
    $region32: #{feed_forward.1} parent=1 // pred_region
      %72 = dma.done [#allocation9], 6144
    $region33: #{feed_forward.1} parent=1 // pred_fallthru
      _
    %v73 = vld [vmem:[#allocation2] sm:$0xff]
    %v74 = vld [vmem:[#allocation2 + $0x8] sm:$0xff]
    %v75 = vld [vmem:[#allocation5] sm:$0xff]
    %v76 = vld [vmem:[#allocation5 + $0x8] sm:$0xff]
    %v77 = vld [vmem:[#allocation5 + $0x10] sm:$0xff]
    %v78 = vld [vmem:[#allocation5 + $0x18] sm:$0xff]
    %v79 = vld [vmem:[#allocation5 + $0x20] sm:$0xff]
    %v80 = vld [vmem:[#allocation5 + $0x28] sm:$0xff]
    %v81 = vld [vmem:[#allocation5 + $0x30] sm:$0xff]
    %v82 = vld [vmem:[#allocation5 + $0x38] sm:$0xff]
    %v83 = vld [vmem:[#allocation5 + $0x40] sm:$0xff]
    %v84 = vld [vmem:[#allocation5 + $0x48] sm:$0xff]
    %v85 = vld [vmem:[#allocation5 + $0x50] sm:$0xff]
    %v86 = vld [vmem:[#allocation5 + $0x58] sm:$0xff]
    %v87 = vld [vmem:[#allocation5 + $0x60] sm:$0xff]
    %v88 = vld [vmem:[#allocation5 + $0x68] sm:$0xff]
    %v89 = vld [vmem:[#allocation5 + $0x70] sm:$0xff]
    %v90 = vld [vmem:[#allocation5 + $0x78] sm:$0xff]
    %v91 = vld [vmem:[#allocation5 + $0x80] sm:$0xff]
    %v92 = vld [vmem:[#allocation5 + $0x88] sm:$0xff]
    %v93 = vld [vmem:[#allocation5 + $0x90] sm:$0xff]
    %v94 = vld [vmem:[#allocation5 + $0x98] sm:$0xff]
    %v95 = vld [vmem:[#allocation5 + $0xa0] sm:$0xff]
    %v96 = vld [vmem:[#allocation5 + $0xa8] sm:$0xff]
    %v97 = vld [vmem:[#allocation5 + $0xb0] sm:$0xff]
    %v98 = vld [vmem:[#allocation5 + $0xb8] sm:$0xff]
    %v99 = vld [vmem:[#allocation5 + $0xc0] sm:$0xff]
    %v100 = vld [vmem:[#allocation5 + $0xc8] sm:$0xff]
    %v101 = vld [vmem:[#allocation5 + $0xd0] sm:$0xff]
    %v102 = vld [vmem:[#allocation5 + $0xd8] sm:$0xff]
    %v103 = vld [vmem:[#allocation5 + $0xe0] sm:$0xff]
    %v104 = vld [vmem:[#allocation5 + $0xe8] sm:$0xff]
    %v105 = vld [vmem:[#allocation5 + $0xf0] sm:$0xff]
    %v106 = vld [vmem:[#allocation5 + $0xf8] sm:$0xff]
    %v107 = vld [vmem:[#allocation5 + $0x100] sm:$0xff]
    %v108 = vld [vmem:[#allocation5 + $0x108] sm:$0xff]
    %v109 = vld [vmem:[#allocation5 + $0x110] sm:$0xff]
    %v110 = vld [vmem:[#allocation5 + $0x118] sm:$0xff]
    %v111 = vld [vmem:[#allocation5 + $0x120] sm:$0xff]
    %v112 = vld [vmem:[#allocation5 + $0x128] sm:$0xff]
    %v113 = vld [vmem:[#allocation5 + $0x130] sm:$0xff]
    %v114 = vld [vmem:[#allocation5 + $0x138] sm:$0xff]
    %v115 = vld [vmem:[#allocation5 + $0x140] sm:$0xff]
    %v116 = vld [vmem:[#allocation5 + $0x148] sm:$0xff]
    %v117 = vld [vmem:[#allocation5 + $0x150] sm:$0xff]
    %v118 = vld [vmem:[#allocation5 + $0x158] sm:$0xff]
    %v119 = vld [vmem:[#allocation5 + $0x160] sm:$0xff]
    %v120 = vld [vmem:[#allocation5 + $0x168] sm:$0xff]
    %v121 = vld [vmem:[#allocation5 + $0x170] sm:$0xff]
    %v122 = vld [vmem:[#allocation5 + $0x178] sm:$0xff]
    %123 = vmatprep.subr.mxu0 0.0
    %124 = vmatpush1.xpose.msra.mxu0 %v90
    %125 = vmatprep.subr.mxu0 0.0
    %126 = vmatpush1.xpose.msra.mxu0 %v89
    %127 = vmatprep.subr.mxu0 0.0
    %128 = vmatpush1.xpose.msra.mxu0 %v88
    %129 = vmatprep.subr.mxu0 0.0
    %130 = vmatpush1.xpose.msra.mxu0 %v87
    %131 = vmatprep.subr.mxu0 0.0
    %132 = vmatpush1.xpose.msra.mxu0 %v86
    %133 = vmatprep.subr.mxu0 0.0
    %134 = vmatpush1.xpose.msra.mxu0 %v85
    %135 = vmatprep.subr.mxu0 0.0
    %136 = vmatpush1.xpose.msra.mxu0 %v84
    %137 = vmatprep.subr.mxu0 0.0
    %138 = vmatpush1.xpose.msra.mxu0 %v83
    %139 = vmatprep.subr.mxu0 0.0
    %140 = vmatpush1.xpose.msra.mxu0 %v82
    %141 = vmatprep.subr.mxu0 0.0
    %142 = vmatpush1.xpose.msra.mxu0 %v81
    %143 = vmatprep.subr.mxu0 0.0
    %144 = vmatpush1.xpose.msra.mxu0 %v80
    %145 = vmatprep.subr.mxu0 0.0
    %146 = vmatpush1.xpose.msra.mxu0 %v79
    %147 = vmatprep.subr.mxu0 0.0
    %148 = vmatpush1.xpose.msra.mxu0 %v78
    %149 = vmatprep.subr.mxu0 0.0
    %150 = vmatpush1.xpose.msra.mxu0 %v77
    %151 = vmatprep.subr.mxu0 0.0
    %152 = vmatpush1.xpose.msra.mxu0 %v76
    %153 = vmatprep.subr.mxu0 0.0
    %154 = vmatpush1.xpose.msra.mxu0 %v75
    %155 = vmatprep.subr.mxu0 0.0
    %156 = vmatpush2.xpose.msra.mxu0 %v106
    %157 = vmatprep.subr.mxu0 0.0
    %158 = vmatpush2.xpose.msra.mxu0 %v105
    %159 = vmatprep.subr.mxu0 0.0
    %160 = vmatpush2.xpose.msra.mxu0 %v104
    %161 = vmatprep.subr.mxu0 0.0
    %162 = vmatpush2.xpose.msra.mxu0 %v103
    %163 = vmatprep.subr.mxu0 0.0
    %164 = vmatpush2.xpose.msra.mxu0 %v102
    %165 = vmatprep.subr.mxu0 0.0
    %166 = vmatpush2.xpose.msra.mxu0 %v101
    %167 = vmatprep.subr.mxu0 0.0
    %168 = vmatpush2.xpose.msra.mxu0 %v100
    %169 = vmatprep.subr.mxu0 0.0
    %170 = vmatpush2.xpose.msra.mxu0 %v99
    %171 = vmatprep.subr.mxu0 0.0
    %172 = vmatpush2.xpose.msra.mxu0 %v98
    %173 = vmatprep.subr.mxu0 0.0
    %174 = vmatpush2.xpose.msra.mxu0 %v97
    %175 = vmatprep.subr.mxu0 0.0
    %176 = vmatpush2.xpose.msra.mxu0 %v96
    %177 = vmatprep.subr.mxu0 0.0
    %178 = vmatpush2.xpose.msra.mxu0 %v95
    %179 = vmatprep.subr.mxu0 0.0
    %180 = vmatpush2.xpose.msra.mxu0 %v94
    %181 = vmatprep.subr.mxu0 0.0
    %182 = vmatpush2.xpose.msra.mxu0 %v93
    %183 = vmatprep.subr.mxu0 0.0
    %184 = vmatpush2.xpose.msra.mxu0 %v92
    %185 = vmatprep.subr.mxu0 0.0
    %186 = vmatpush2.xpose.msra.mxu0 %v91
    %187 = vmatprep.mubr.f32.mxu0 0.0
    %188 = vmatmul.mubr.f32.gmra.mxu0 %v73
    %v189 = vpop.f32.mrf.mxu0
    %v190 = vadd.f32 0.0, %v189
    %v191 = vpop.f32.mrf.mxu0
    %v192 = vadd.f32 0.0, %v191
    %193 = vmatprep.mubr.f32.mxu0 0.0
    %194 = vmatmul.mubr.f32.gmra.mxu0 %v74
    %v195 = vpop.f32.mrf.mxu0
    %v196 = vadd.f32 0.0, %v195
    %v197 = vpop.f32.mrf.mxu0
    %v198 = vadd.f32 0.0, %v197
    %199 = vdwg.mxu0
    %200 = vmatprep.subr.mxu0 0.0
    %201 = vmatpush1.xpose.msra.mxu0 %v122
    %202 = vmatprep.subr.mxu0 0.0
    %203 = vmatpush1.xpose.msra.mxu0 %v121
    %204 = vmatprep.subr.mxu0 0.0
    %205 = vmatpush1.xpose.msra.mxu0 %v120
    %206 = vmatprep.subr.mxu0 0.0
    %207 = vmatpush1.xpose.msra.mxu0 %v119
    %208 = vmatprep.subr.mxu0 0.0
    %209 = vmatpush1.xpose.msra.mxu0 %v118
    %210 = vmatprep.subr.mxu0 0.0
    %211 = vmatpush1.xpose.msra.mxu0 %v117
    %212 = vmatprep.subr.mxu0 0.0
    %213 = vmatpush1.xpose.msra.mxu0 %v116
    %214 = vmatprep.subr.mxu0 0.0
    %215 = vmatpush1.xpose.msra.mxu0 %v115
    %216 = vmatprep.subr.mxu0 0.0
    %217 = vmatpush1.xpose.msra.mxu0 %v114
    %218 = vmatprep.subr.mxu0 0.0
    %219 = vmatpush1.xpose.msra.mxu0 %v113
    %220 = vmatprep.subr.mxu0 0.0
    %221 = vmatpush1.xpose.msra.mxu0 %v112
    %222 = vmatprep.subr.mxu0 0.0
    %223 = vmatpush1.xpose.msra.mxu0 %v111
    %224 = vmatprep.subr.mxu0 0.0
    %225 = vmatpush1.xpose.msra.mxu0 %v110
    %226 = vmatprep.subr.mxu0 0.0
    %227 = vmatpush1.xpose.msra.mxu0 %v109
    %228 = vmatprep.subr.mxu0 0.0
    %229 = vmatpush1.xpose.msra.mxu0 %v108
    %230 = vmatprep.subr.mxu0 0.0
    %231 = vmatpush1.xpose.msra.mxu0 %v107
    %232 = vmatprep.subr.mxu0 0.0
    %233 = vmatpush2.xpose.msra.mxu0 0.0
    %234 = vmatprep.subr.mxu0 0.0
    %235 = vmatpush2.xpose.msra.mxu0 0.0
    %236 = vmatprep.subr.mxu0 0.0
    %237 = vmatpush2.xpose.msra.mxu0 0.0
    %238 = vmatprep.subr.mxu0 0.0
    %239 = vmatpush2.xpose.msra.mxu0 0.0
    %240 = vmatprep.subr.mxu0 0.0
    %241 = vmatpush2.xpose.msra.mxu0 0.0
    %242 = vmatprep.subr.mxu0 0.0
    %243 = vmatpush2.xpose.msra.mxu0 0.0
    %244 = vmatprep.subr.mxu0 0.0
    %245 = vmatpush2.xpose.msra.mxu0 0.0
    %246 = vmatprep.subr.mxu0 0.0
    %247 = vmatpush2.xpose.msra.mxu0 0.0
    %248 = vmatprep.subr.mxu0 0.0
    %249 = vmatpush2.xpose.msra.mxu0 0.0
    %250 = vmatprep.subr.mxu0 0.0
    %251 = vmatpush2.xpose.msra.mxu0 0.0
    %252 = vmatprep.subr.mxu0 0.0
    %253 = vmatpush2.xpose.msra.mxu0 0.0
    %254 = vmatprep.subr.mxu0 0.0
    %255 = vmatpush2.xpose.msra.mxu0 0.0
    %256 = vmatprep.subr.mxu0 0.0
    %257 = vmatpush2.xpose.msra.mxu0 0.0
    %258 = vmatprep.subr.mxu0 0.0
    %259 = vmatpush2.xpose.msra.mxu0 0.0
    %260 = vmatprep.subr.mxu0 0.0
    %261 = vmatpush2.xpose.msra.mxu0 0.0
    %262 = vmatprep.subr.mxu0 0.0
    %263 = vmatpush2.xpose.msra.mxu0 0.0
    %264 = vmatprep.mubr.f32.mxu0 0.0
    %265 = vmatmul.mubr.f32.gmra.mxu0 %v73
    %v266 = vpop.f32.mrf.mxu0
    %v267 = vadd.f32 0.0, %v266
    %v268 = vpop.f32.mrf.mxu0
    %269 = vmatprep.mubr.f32.mxu0 0.0
    %270 = vmatmul.mubr.f32.gmra.mxu0 %v74
    %v271 = vpop.f32.mrf.mxu0
    %v272 = vadd.f32 0.0, %v271
    %v273 = vpop.f32.mrf.mxu0
    %274 = vdwg.mxu0
    %v275 = vld [vmem:[#allocation7] sm:$0xff]
    %v276 = vld [vmem:[#allocation7 + $0x8] sm:$0xff]
    %v277 = vld [vmem:[#allocation7 + $0x10] sm:$0xff]
    %v278 = vld [vmem:[#allocation7 + $0x18] sm:$0xff]
    %v279 = vld [vmem:[#allocation7 + $0x20] sm:$0xff]
    %v280 = vld [vmem:[#allocation7 + $0x28] sm:$0xff]
    %v281 = vld [vmem:[#allocation7 + $0x30] sm:$0xff]
    %v282 = vld [vmem:[#allocation7 + $0x38] sm:$0xff]
    %v283 = vld [vmem:[#allocation7 + $0x40] sm:$0xff]
    %v284 = vld [vmem:[#allocation7 + $0x48] sm:$0xff]
    %v285 = vld [vmem:[#allocation7 + $0x50] sm:$0xff]
    %v286 = vld [vmem:[#allocation7 + $0x58] sm:$0xff]
    %v287 = vld [vmem:[#allocation7 + $0x60] sm:$0xff]
    %v288 = vld [vmem:[#allocation7 + $0x68] sm:$0xff]
    %v289 = vld [vmem:[#allocation7 + $0x70] sm:$0xff]
    %v290 = vld [vmem:[#allocation7 + $0x78] sm:$0xff]
    %v291 = vld [vmem:[#allocation7 + $0x80] sm:$0xff]
    %v292 = vld [vmem:[#allocation7 + $0x88] sm:$0xff]
    %v293 = vld [vmem:[#allocation7 + $0x90] sm:$0xff]
    %v294 = vld [vmem:[#allocation7 + $0x98] sm:$0xff]
    %v295 = vld [vmem:[#allocation7 + $0xa0] sm:$0xff]
    %v296 = vld [vmem:[#allocation7 + $0xa8] sm:$0xff]
    %v297 = vld [vmem:[#allocation7 + $0xb0] sm:$0xff]
    %v298 = vld [vmem:[#allocation7 + $0xb8] sm:$0xff]
    %v299 = vld [vmem:[#allocation7 + $0xc0] sm:$0xff]
    %v300 = vld [vmem:[#allocation7 + $0xc8] sm:$0xff]
    %v301 = vld [vmem:[#allocation7 + $0xd0] sm:$0xff]
    %v302 = vld [vmem:[#allocation7 + $0xd8] sm:$0xff]
    %v303 = vld [vmem:[#allocation7 + $0xe0] sm:$0xff]
    %v304 = vld [vmem:[#allocation7 + $0xe8] sm:$0xff]
    %v305 = vld [vmem:[#allocation7 + $0xf0] sm:$0xff]
    %v306 = vld [vmem:[#allocation7 + $0xf8] sm:$0xff]
    %v307 = vld [vmem:[#allocation7 + $0x100] sm:$0xff]
    %v308 = vld [vmem:[#allocation7 + $0x108] sm:$0xff]
    %v309 = vld [vmem:[#allocation7 + $0x110] sm:$0xff]
    %v310 = vld [vmem:[#allocation7 + $0x118] sm:$0xff]
    %v311 = vld [vmem:[#allocation7 + $0x120] sm:$0xff]
    %v312 = vld [vmem:[#allocation7 + $0x128] sm:$0xff]
    %v313 = vld [vmem:[#allocation7 + $0x130] sm:$0xff]
    %v314 = vld [vmem:[#allocation7 + $0x138] sm:$0xff]
    %v315 = vld [vmem:[#allocation7 + $0x140] sm:$0xff]
    %v316 = vld [vmem:[#allocation7 + $0x148] sm:$0xff]
    %v317 = vld [vmem:[#allocation7 + $0x150] sm:$0xff]
    %v318 = vld [vmem:[#allocation7 + $0x158] sm:$0xff]
    %v319 = vld [vmem:[#allocation7 + $0x160] sm:$0xff]
    %v320 = vld [vmem:[#allocation7 + $0x168] sm:$0xff]
    %v321 = vld [vmem:[#allocation7 + $0x170] sm:$0xff]
    %v322 = vld [vmem:[#allocation7 + $0x178] sm:$0xff]
    %323 = vmatprep.subr.mxu0 0.0
    %324 = vmatpush1.xpose.msra.mxu0 %v290
    %325 = vmatprep.subr.mxu0 0.0
    %326 = vmatpush1.xpose.msra.mxu0 %v289
    %327 = vmatprep.subr.mxu0 0.0
    %328 = vmatpush1.xpose.msra.mxu0 %v288
    %329 = vmatprep.subr.mxu0 0.0
    %330 = vmatpush1.xpose.msra.mxu0 %v287
    %331 = vmatprep.subr.mxu0 0.0
    %332 = vmatpush1.xpose.msra.mxu0 %v286
    %333 = vmatprep.subr.mxu0 0.0
    %334 = vmatpush1.xpose.msra.mxu0 %v285
    %335 = vmatprep.subr.mxu0 0.0
    %336 = vmatpush1.xpose.msra.mxu0 %v284
    %337 = vmatprep.subr.mxu0 0.0
    %338 = vmatpush1.xpose.msra.mxu0 %v283
    %339 = vmatprep.subr.mxu0 0.0
    %340 = vmatpush1.xpose.msra.mxu0 %v282
    %341 = vmatprep.subr.mxu0 0.0
    %342 = vmatpush1.xpose.msra.mxu0 %v281
    %343 = vmatprep.subr.mxu0 0.0
    %344 = vmatpush1.xpose.msra.mxu0 %v280
    %345 = vmatprep.subr.mxu0 0.0
    %346 = vmatpush1.xpose.msra.mxu0 %v279
    %347 = vmatprep.subr.mxu0 0.0
    %348 = vmatpush1.xpose.msra.mxu0 %v278
    %349 = vmatprep.subr.mxu0 0.0
    %350 = vmatpush1.xpose.msra.mxu0 %v277
    %351 = vmatprep.subr.mxu0 0.0
    %352 = vmatpush1.xpose.msra.mxu0 %v276
    %353 = vmatprep.subr.mxu0 0.0
    %354 = vmatpush1.xpose.msra.mxu0 %v275
    %355 = vmatprep.subr.mxu0 0.0
    %356 = vmatpush2.xpose.msra.mxu0 %v306
    %357 = vmatprep.subr.mxu0 0.0
    %358 = vmatpush2.xpose.msra.mxu0 %v305
    %359 = vmatprep.subr.mxu0 0.0
    %360 = vmatpush2.xpose.msra.mxu0 %v304
    %361 = vmatprep.subr.mxu0 0.0
    %362 = vmatpush2.xpose.msra.mxu0 %v303
    %363 = vmatprep.subr.mxu0 0.0
    %364 = vmatpush2.xpose.msra.mxu0 %v302
    %365 = vmatprep.subr.mxu0 0.0
    %366 = vmatpush2.xpose.msra.mxu0 %v301
    %367 = vmatprep.subr.mxu0 0.0
    %368 = vmatpush2.xpose.msra.mxu0 %v300
    %369 = vmatprep.subr.mxu0 0.0
    %370 = vmatpush2.xpose.msra.mxu0 %v299
    %371 = vmatprep.subr.mxu0 0.0
    %372 = vmatpush2.xpose.msra.mxu0 %v298
    %373 = vmatprep.subr.mxu0 0.0
    %374 = vmatpush2.xpose.msra.mxu0 %v297
    %375 = vmatprep.subr.mxu0 0.0
    %376 = vmatpush2.xpose.msra.mxu0 %v296
    %377 = vmatprep.subr.mxu0 0.0
    %378 = vmatpush2.xpose.msra.mxu0 %v295
    %379 = vmatprep.subr.mxu0 0.0
    %380 = vmatpush2.xpose.msra.mxu0 %v294
    %381 = vmatprep.subr.mxu0 0.0
    %382 = vmatpush2.xpose.msra.mxu0 %v293
    %383 = vmatprep.subr.mxu0 0.0
    %384 = vmatpush2.xpose.msra.mxu0 %v292
    %385 = vmatprep.subr.mxu0 0.0
    %386 = vmatpush2.xpose.msra.mxu0 %v291
    %387 = vmatprep.mubr.f32.mxu0 0.0
    %388 = vmatmul.mubr.f32.gmra.mxu0 %v73
    %v389 = vpop.f32.mrf.mxu0
    %v390 = vadd.f32 0.0, %v389
    %v391 = vpop.f32.mrf.mxu0
    %v392 = vadd.f32 0.0, %v391
    %393 = vmatprep.mubr.f32.mxu0 0.0
    %394 = vmatmul.mubr.f32.gmra.mxu0 %v74
    %v395 = vpop.f32.mrf.mxu0
    %v396 = vadd.f32 0.0, %v395
    %v397 = vpop.f32.mrf.mxu0
    %v398 = vadd.f32 0.0, %v397
    %399 = vdwg.mxu0
    %400 = vmatprep.subr.mxu0 0.0
    %401 = vmatpush1.xpose.msra.mxu0 %v322
    %402 = vmatprep.subr.mxu0 0.0
    %403 = vmatpush1.xpose.msra.mxu0 %v321
    %404 = vmatprep.subr.mxu0 0.0
    %405 = vmatpush1.xpose.msra.mxu0 %v320
    %406 = vmatprep.subr.mxu0 0.0
    %407 = vmatpush1.xpose.msra.mxu0 %v319
    %408 = vmatprep.subr.mxu0 0.0
    %409 = vmatpush1.xpose.msra.mxu0 %v318
    %410 = vmatprep.subr.mxu0 0.0
    %411 = vmatpush1.xpose.msra.mxu0 %v317
    %412 = vmatprep.subr.mxu0 0.0
    %413 = vmatpush1.xpose.msra.mxu0 %v316
    %414 = vmatprep.subr.mxu0 0.0
    %415 = vmatpush1.xpose.msra.mxu0 %v315
    %416 = vmatprep.subr.mxu0 0.0
    %417 = vmatpush1.xpose.msra.mxu0 %v314
    %418 = vmatprep.subr.mxu0 0.0
    %419 = vmatpush1.xpose.msra.mxu0 %v313
    %420 = vmatprep.subr.mxu0 0.0
    %421 = vmatpush1.xpose.msra.mxu0 %v312
    %422 = vmatprep.subr.mxu0 0.0
    %423 = vmatpush1.xpose.msra.mxu0 %v311
    %424 = vmatprep.subr.mxu0 0.0
    %425 = vmatpush1.xpose.msra.mxu0 %v310
    %426 = vmatprep.subr.mxu0 0.0
    %427 = vmatpush1.xpose.msra.mxu0 %v309
    %428 = vmatprep.subr.mxu0 0.0
    %429 = vmatpush1.xpose.msra.mxu0 %v308
    %430 = vmatprep.subr.mxu0 0.0
    %431 = vmatpush1.xpose.msra.mxu0 %v307
    %432 = vmatprep.subr.mxu0 0.0
    %433 = vmatpush2.xpose.msra.mxu0 0.0
    %434 = vmatprep.subr.mxu0 0.0
    %435 = vmatpush2.xpose.msra.mxu0 0.0
    %436 = vmatprep.subr.mxu0 0.0
    %437 = vmatpush2.xpose.msra.mxu0 0.0
    %438 = vmatprep.subr.mxu0 0.0
    %439 = vmatpush2.xpose.msra.mxu0 0.0
    %440 = vmatprep.subr.mxu0 0.0
    %441 = vmatpush2.xpose.msra.mxu0 0.0
    %442 = vmatprep.subr.mxu0 0.0
    %443 = vmatpush2.xpose.msra.mxu0 0.0
    %444 = vmatprep.subr.mxu0 0.0
    %445 = vmatpush2.xpose.msra.mxu0 0.0
    %446 = vmatprep.subr.mxu0 0.0
    %447 = vmatpush2.xpose.msra.mxu0 0.0
    %448 = vmatprep.subr.mxu0 0.0
    %449 = vmatpush2.xpose.msra.mxu0 0.0
    %450 = vmatprep.subr.mxu0 0.0
    %451 = vmatpush2.xpose.msra.mxu0 0.0
    %452 = vmatprep.subr.mxu0 0.0
    %453 = vmatpush2.xpose.msra.mxu0 0.0
    %454 = vmatprep.subr.mxu0 0.0
    %455 = vmatpush2.xpose.msra.mxu0 0.0
    %456 = vmatprep.subr.mxu0 0.0
    %457 = vmatpush2.xpose.msra.mxu0 0.0
    %458 = vmatprep.subr.mxu0 0.0
    %459 = vmatpush2.xpose.msra.mxu0 0.0
    %460 = vmatprep.subr.mxu0 0.0
    %461 = vmatpush2.xpose.msra.mxu0 0.0
    %462 = vmatprep.subr.mxu0 0.0
    %463 = vmatpush2.xpose.msra.mxu0 0.0
    %464 = vmatprep.mubr.f32.mxu0 0.0
    %465 = vmatmul.mubr.f32.gmra.mxu0 %v73
    %v466 = vpop.f32.mrf.mxu0
    %v467 = vadd.f32 0.0, %v466
    %v468 = vpop.f32.mrf.mxu0
    %469 = vmatprep.mubr.f32.mxu0 0.0
    %470 = vmatmul.mubr.f32.gmra.mxu0 %v74
    %v471 = vpop.f32.mrf.mxu0
    %v472 = vadd.f32 0.0, %v471
    %v473 = vpop.f32.mrf.mxu0
    %474 = vdwg.mxu0
    %v475 = vxor.u32 %v190, 2147483648
    %v476 = vxor.u32 %v192, 2147483648
    %v477 = vxor.u32 %v267, 2147483648
    %v478 = vxor.u32 %v196, 2147483648
    %v479 = vxor.u32 %v198, 2147483648
    %v480 = vxor.u32 %v272, 2147483648
    %v481 = vmul.f32 %v475, 1.442695
    %v482 = vpow.pop %v481
    %v483 = vmul.f32 %v476, 1.442695
    %v484 = vpow.pop %v483
    %v485 = vmul.f32 %v477, 1.442695
    %v486 = vpow.pop %v485
    %v487 = vmul.f32 %v478, 1.442695
    %v488 = vpow.pop %v487
    %v489 = vmul.f32 %v479, 1.442695
    %v490 = vpow.pop %v489
    %v491 = vmul.f32 %v480, 1.442695
    %v492 = vpow.pop %v491
    %v493 = vadd.f32 %v482, 1.0
    %v494 = vadd.f32 %v484, 1.0
    %v495 = vadd.f32 %v486, 1.0
    %v496 = vadd.f32 %v488, 1.0
    %v497 = vadd.f32 %v490, 1.0
    %v498 = vadd.f32 %v492, 1.0
    %v499 = vrcp.pop %v493
    %v500 = vmul.f32 1.0, %v499
    %v501 = vrcp.pop %v494
    %v502 = vmul.f32 1.0, %v501
    %v503 = vrcp.pop %v495
    %v504 = vmul.f32 1.0, %v503
    %v505 = vrcp.pop %v496
    %v506 = vmul.f32 1.0, %v505
    %v507 = vrcp.pop %v497
    %v508 = vmul.f32 1.0, %v507
    %v509 = vrcp.pop %v498
    %v510 = vmul.f32 1.0, %v509
    %v511 = vmul.f32 %v190, %v500
    %v512 = vmul.f32 %v192, %v502
    %v513 = vmul.f32 %v267, %v504
    %v514 = vmul.f32 %v196, %v506
    %v515 = vmul.f32 %v198, %v508
    %v516 = vmul.f32 %v272, %v510
    %v517 = vmul.f32 %v511, %v390
    %v518 = vmul.f32 %v512, %v392
    %v519 = vmul.f32 %v513, %v467
    %v520 = vmul.f32 %v514, %v396
    %v521 = vmul.f32 %v515, %v398
    %v522 = vmul.f32 %v516, %v472
    %v523 = vld [vmem:[#allocation8] sm:$0xff]
    %v524 = vld [vmem:[#allocation8 + $0x8] sm:$0xff]
    %v525 = vld [vmem:[#allocation8 + $0x10] sm:$0xff]
    %v526 = vld [vmem:[#allocation8 + $0x18] sm:$0xff]
    %v527 = vld [vmem:[#allocation8 + $0x20] sm:$0xff]
    %v528 = vld [vmem:[#allocation8 + $0x28] sm:$0xff]
    %v529 = vld [vmem:[#allocation8 + $0x30] sm:$0xff]
    %v530 = vld [vmem:[#allocation8 + $0x38] sm:$0xff]
    %v531 = vld [vmem:[#allocation8 + $0x40] sm:$0xff]
    %v532 = vld [vmem:[#allocation8 + $0x48] sm:$0xff]
    %v533 = vld [vmem:[#allocation8 + $0x50] sm:$0xff]
    %v534 = vld [vmem:[#allocation8 + $0x58] sm:$0xff]
    %v535 = vld [vmem:[#allocation8 + $0x60] sm:$0xff]
    %v536 = vld [vmem:[#allocation8 + $0x68] sm:$0xff]
    %v537 = vld [vmem:[#allocation8 + $0x70] sm:$0xff]
    %v538 = vld [vmem:[#allocation8 + $0x78] sm:$0xff]
    %v539 = vld [vmem:[#allocation8 + $0x80] sm:$0xff]
    %v540 = vld [vmem:[#allocation8 + $0x88] sm:$0xff]
    %v541 = vld [vmem:[#allocation8 + $0x90] sm:$0xff]
    %v542 = vld [vmem:[#allocation8 + $0x98] sm:$0xff]
    %v543 = vld [vmem:[#allocation8 + $0xa0] sm:$0xff]
    %v544 = vld [vmem:[#allocation8 + $0xa8] sm:$0xff]
    %v545 = vld [vmem:[#allocation8 + $0xb0] sm:$0xff]
    %v546 = vld [vmem:[#allocation8 + $0xb8] sm:$0xff]
    %v547 = vld [vmem:[#allocation8 + $0xc0] sm:$0xff]
    %v548 = vld [vmem:[#allocation8 + $0xc8] sm:$0xff]
    %v549 = vld [vmem:[#allocation8 + $0xd0] sm:$0xff]
    %v550 = vld [vmem:[#allocation8 + $0xd8] sm:$0xff]
    %v551 = vld [vmem:[#allocation8 + $0xe0] sm:$0xff]
    %v552 = vld [vmem:[#allocation8 + $0xe8] sm:$0xff]
    %v553 = vld [vmem:[#allocation8 + $0xf0] sm:$0xff]
    %v554 = vld [vmem:[#allocation8 + $0xf8] sm:$0xff]
    %v555 = vld [vmem:[#allocation8 + $0x100] sm:$0xff]
    %v556 = vld [vmem:[#allocation8 + $0x108] sm:$0xff]
    %v557 = vld [vmem:[#allocation8 + $0x110] sm:$0xff]
    %v558 = vld [vmem:[#allocation8 + $0x118] sm:$0xff]
    %v559 = vld [vmem:[#allocation8 + $0x120] sm:$0xff]
    %v560 = vld [vmem:[#allocation8 + $0x128] sm:$0xff]
    %v561 = vld [vmem:[#allocation8 + $0x130] sm:$0xff]
    %v562 = vld [vmem:[#allocation8 + $0x138] sm:$0xff]
    %v563 = vld [vmem:[#allocation8 + $0x140] sm:$0xff]
    %v564 = vld [vmem:[#allocation8 + $0x148] sm:$0xff]
    %v565 = vld [vmem:[#allocation8 + $0x150] sm:$0xff]
    %v566 = vld [vmem:[#allocation8 + $0x158] sm:$0xff]
    %v567 = vld [vmem:[#allocation8 + $0x160] sm:$0xff]
    %v568 = vld [vmem:[#allocation8 + $0x168] sm:$0xff]
    %v569 = vld [vmem:[#allocation8 + $0x170] sm:$0xff]
    %v570 = vld [vmem:[#allocation8 + $0x178] sm:$0xff]
    %571 = vmatprep.subr.mxu0 %v569
    %572 = vmatpush1.xpose.msra.mxu0 %v568
    %573 = vmatprep.subr.mxu0 %v566
    %574 = vmatpush1.xpose.msra.mxu0 %v565
    %575 = vmatprep.subr.mxu0 %v563
    %576 = vmatpush1.xpose.msra.mxu0 %v562
    %577 = vmatprep.subr.mxu0 %v560
    %578 = vmatpush1.xpose.msra.mxu0 %v559
    %579 = vmatprep.subr.mxu0 %v557
    %580 = vmatpush1.xpose.msra.mxu0 %v556
    %581 = vmatprep.subr.mxu0 %v554
    %582 = vmatpush1.xpose.msra.mxu0 %v553
    %583 = vmatprep.subr.mxu0 %v551
    %584 = vmatpush1.xpose.msra.mxu0 %v550
    %585 = vmatprep.subr.mxu0 %v548
    %586 = vmatpush1.xpose.msra.mxu0 %v547
    %587 = vmatprep.subr.mxu0 %v545
    %588 = vmatpush1.xpose.msra.mxu0 %v544
    %589 = vmatprep.subr.mxu0 %v542
    %590 = vmatpush1.xpose.msra.mxu0 %v541
    %591 = vmatprep.subr.mxu0 %v539
    %592 = vmatpush1.xpose.msra.mxu0 %v538
    %593 = vmatprep.subr.mxu0 %v536
    %594 = vmatpush1.xpose.msra.mxu0 %v535
    %595 = vmatprep.subr.mxu0 %v533
    %596 = vmatpush1.xpose.msra.mxu0 %v532
    %597 = vmatprep.subr.mxu0 %v530
    %598 = vmatpush1.xpose.msra.mxu0 %v529
    %599 = vmatprep.subr.mxu0 %v527
    %600 = vmatpush1.xpose.msra.mxu0 %v526
    %601 = vmatprep.subr.mxu0 %v524
    %602 = vmatpush1.xpose.msra.mxu0 %v523
    %603 = vmatprep.subr.mxu0 0.0
    %604 = vmatpush2.xpose.msra.mxu0 0.0
    %605 = vmatprep.subr.mxu0 0.0
    %606 = vmatpush2.xpose.msra.mxu0 0.0
    %607 = vmatprep.subr.mxu0 0.0
    %608 = vmatpush2.xpose.msra.mxu0 0.0
    %609 = vmatprep.subr.mxu0 0.0
    %610 = vmatpush2.xpose.msra.mxu0 0.0
    %611 = vmatprep.subr.mxu0 0.0
    %612 = vmatpush2.xpose.msra.mxu0 0.0
    %613 = vmatprep.subr.mxu0 0.0
    %614 = vmatpush2.xpose.msra.mxu0 0.0
    %615 = vmatprep.subr.mxu0 0.0
    %616 = vmatpush2.xpose.msra.mxu0 0.0
    %617 = vmatprep.subr.mxu0 0.0
    %618 = vmatpush2.xpose.msra.mxu0 0.0
    %619 = vmatprep.subr.mxu0 0.0
    %620 = vmatpush2.xpose.msra.mxu0 0.0
    %621 = vmatprep.subr.mxu0 0.0
    %622 = vmatpush2.xpose.msra.mxu0 0.0
    %623 = vmatprep.subr.mxu0 0.0
    %624 = vmatpush2.xpose.msra.mxu0 0.0
    %625 = vmatprep.subr.mxu0 0.0
    %626 = vmatpush2.xpose.msra.mxu0 0.0
    %627 = vmatprep.subr.mxu0 0.0
    %628 = vmatpush2.xpose.msra.mxu0 0.0
    %629 = vmatprep.subr.mxu0 0.0
    %630 = vmatpush2.xpose.msra.mxu0 0.0
    %631 = vmatprep.subr.mxu0 0.0
    %632 = vmatpush2.xpose.msra.mxu0 0.0
    %633 = vmatprep.subr.mxu0 0.0
    %634 = vmatpush2.xpose.msra.mxu0 0.0
    %635 = vmatprep.mubr.f32.mxu0 %v518
    %636 = vmatmul.mubr.f32.gmra.mxu0 %v517
    %v637 = vpop.f32.mrf.mxu0
    %v638 = vadd.f32 0.0, %v637
    %v639 = vpop.f32.mrf.mxu0
    %640 = vmatprep.mubr.f32.mxu0 %v521
    %641 = vmatmul.mubr.f32.gmra.mxu0 %v520
    %v642 = vpop.f32.mrf.mxu0
    %v643 = vadd.f32 0.0, %v642
    %v644 = vpop.f32.mrf.mxu0
    %645 = vdwg.mxu0
    %646 = vmatprep.subr.mxu0 0.0
    %647 = vmatpush1.xpose.msra.mxu0 %v570
    %648 = vmatprep.subr.mxu0 0.0
    %649 = vmatpush1.xpose.msra.mxu0 %v567
    %650 = vmatprep.subr.mxu0 0.0
    %651 = vmatpush1.xpose.msra.mxu0 %v564
    %652 = vmatprep.subr.mxu0 0.0
    %653 = vmatpush1.xpose.msra.mxu0 %v561
    %654 = vmatprep.subr.mxu0 0.0
    %655 = vmatpush1.xpose.msra.mxu0 %v558
    %656 = vmatprep.subr.mxu0 0.0
    %657 = vmatpush1.xpose.msra.mxu0 %v555
    %658 = vmatprep.subr.mxu0 0.0
    %659 = vmatpush1.xpose.msra.mxu0 %v552
    %660 = vmatprep.subr.mxu0 0.0
    %661 = vmatpush1.xpose.msra.mxu0 %v549
    %662 = vmatprep.subr.mxu0 0.0
    %663 = vmatpush1.xpose.msra.mxu0 %v546
    %664 = vmatprep.subr.mxu0 0.0
    %665 = vmatpush1.xpose.msra.mxu0 %v543
    %666 = vmatprep.subr.mxu0 0.0
    %667 = vmatpush1.xpose.msra.mxu0 %v540
    %668 = vmatprep.subr.mxu0 0.0
    %669 = vmatpush1.xpose.msra.mxu0 %v537
    %670 = vmatprep.subr.mxu0 0.0
    %671 = vmatpush1.xpose.msra.mxu0 %v534
    %672 = vmatprep.subr.mxu0 0.0
    %673 = vmatpush1.xpose.msra.mxu0 %v531
    %674 = vmatprep.subr.mxu0 0.0
    %675 = vmatpush1.xpose.msra.mxu0 %v528
    %676 = vmatprep.subr.mxu0 0.0
    %677 = vmatpush1.xpose.msra.mxu0 %v525
    %678 = vmatprep.subr.mxu0 0.0
    %679 = vmatpush2.xpose.msra.mxu0 0.0
    %680 = vmatprep.subr.mxu0 0.0
    %681 = vmatpush2.xpose.msra.mxu0 0.0
    %682 = vmatprep.subr.mxu0 0.0
    %683 = vmatpush2.xpose.msra.mxu0 0.0
    %684 = vmatprep.subr.mxu0 0.0
    %685 = vmatpush2.xpose.msra.mxu0 0.0
    %686 = vmatprep.subr.mxu0 0.0
    %687 = vmatpush2.xpose.msra.mxu0 0.0
    %688 = vmatprep.subr.mxu0 0.0
    %689 = vmatpush2.xpose.msra.mxu0 0.0
    %690 = vmatprep.subr.mxu0 0.0
    %691 = vmatpush2.xpose.msra.mxu0 0.0
    %692 = vmatprep.subr.mxu0 0.0
    %693 = vmatpush2.xpose.msra.mxu0 0.0
    %694 = vmatprep.subr.mxu0 0.0
    %695 = vmatpush2.xpose.msra.mxu0 0.0
    %696 = vmatprep.subr.mxu0 0.0
    %697 = vmatpush2.xpose.msra.mxu0 0.0
    %698 = vmatprep.subr.mxu0 0.0
    %699 = vmatpush2.xpose.msra.mxu0 0.0
    %700 = vmatprep.subr.mxu0 0.0
    %701 = vmatpush2.xpose.msra.mxu0 0.0
    %702 = vmatprep.subr.mxu0 0.0
    %703 = vmatpush2.xpose.msra.mxu0 0.0
    %704 = vmatprep.subr.mxu0 0.0
    %705 = vmatpush2.xpose.msra.mxu0 0.0
    %706 = vmatprep.subr.mxu0 0.0
    %707 = vmatpush2.xpose.msra.mxu0 0.0
    %708 = vmatprep.subr.mxu0 0.0
    %709 = vmatpush2.xpose.msra.mxu0 0.0
    %710 = vmatprep.mubr.f32.mxu0 0.0
    %711 = vmatmul.mubr.f32.gmra.mxu0 %v519
    %v712 = vpop.f32.mrf.mxu0
    %v713 = vadd.f32 %v638, %v712
    %v714 = vpop.f32.mrf.mxu0
    %715 = vmatprep.mubr.f32.mxu0 0.0
    %716 = vmatmul.mubr.f32.gmra.mxu0 %v522
    %v717 = vpop.f32.mrf.mxu0
    %v718 = vadd.f32 %v643, %v717
    %v719 = vpop.f32.mrf.mxu0
    %720 = vdwg.mxu0
    %721 = vst [vmem:[#allocation10] sm:$0xff] %v713
    %722 = vst [vmem:[#allocation10 + $0x8] sm:$0xff] %v718
    // Predicated region
    $region34: #{feed_forward.1} parent=1 // pred_check
      _
    $region35: #{feed_forward.1} parent=1 // pred_check_branch
      %724 = sbr.rel (0) target = $region37
    $region36: #{feed_forward.1} parent=1 // pred_region
      %s726 = ssub.s32 256, 256
      %727 = vsyncadd [#allocation4], %s726
      %s728 = sshll.u32 [#allocation10], 4
      %s729 = int_to_ptr.vmem [resolvable:$true] %s728
      %734 = dma.vmem_to_hbm [thread:$0]  %s729, 256, %s4, [#allocation4], 128, 128, 8
    $region37: #{feed_forward.1} parent=1 // pred_fallthru
      _
    // Predicated region
    $region38: #{feed_forward.1} parent=1 // pred_check
      _
    $region39: #{feed_forward.1} parent=1 // pred_check_branch
      %736 = sbr.rel (0) target = $region41
    $region40: #{feed_forward.1} parent=1 // pred_region
      %737 = dma.done [#allocation4], 256
    $region41: #{feed_forward.1} parent=1 // pred_fallthru
      _
    %738 = vsyncpa [#allocation3], 1
    %739 = vsyncpa [#allocation6], 1
    %740 = vsyncpa [#allocation9], 1
    %741 = vsyncpa [#allocation4], 1

</llo_original>
